<compile_context>
chip_gen: v6e
topology: v6e:2x2x1
jax: 0.10.0
libtpu: 0.0.40
codegen_flags: <defaults>
</compile_context>

<pallas_src>
import functools
import math

import jax
import jax.numpy as jnp
from jax import lax
from jax.experimental import pallas as pl
from jax.experimental.pallas import tpu as pltpu


def _lwtl_kernel(sw_ref, freg_ref, feat_ref, wmm_ref, worig_ref, label_ref,
                 data_ref, reg_ref, *, H, W, kH, kW, C):
    # sw_ref    : (N,)            per-image sample weights (SMEM prefetch)
    # freg_ref  : (1,)            filter_reg parameter      (SMEM prefetch)
    # feat_ref  : (1, 1, C, Lpad) H-padded, W-flattened, lane-padded features
    # wmm_ref   : (1, F, K)       filter, tap-major  K = kH*kW*C
    # worig_ref : (1, F, KC)      filter, original element order KC = C*kH*kW
    # label_ref : (1, 1, F, Q)    Q = H*W
    # data_ref  : (1, 1, F, Q)    data residual (lane-dense output)
    # reg_ref   : (1, F, KC)      regularization residual
    n = pl.program_id(1)
    Q = H * W
    pw = kW // 2

    flat = feat_ref[0, 0]                                     # (C, Lpad)
    # Lane-column index within an image row; hoisted out of the tap loop.
    w_idx = lax.broadcasted_iota(jnp.int32, (C, Q), 1) % W

    # Build the im2col matrix (tap-major rows) as a single in-register value.
    pieces = []
    for dy in range(kH):
        for dx in range(kW):
            off = dy * W + dx                                 # static offset
            x = flat[:, off:off + Q]                          # (C, Q)
            d = dx - pw
            if d < 0:                                         # left W-border
                x = jnp.where(w_idx >= -d, x, 0.0)
            elif d > 0:                                       # right W-border
                x = jnp.where(w_idx < W - d, x, 0.0)
            pieces.append(x)
    xcol = jnp.concatenate(pieces, axis=0)                    # (kH*kW*C, Q)

    # Single consolidated MXU contraction: (F, K) @ (K, Q) -> (F, Q).
    scores = jnp.dot(wmm_ref[0], xcol, preferred_element_type=jnp.float32)

    sw = sw_ref[n]
    data_ref[0, 0] = (sw * (scores - label_ref[0, 0])).astype(data_ref.dtype)

    # reg_residual written once per sequence (inner N axis is "arbitrary").
    @pl.when(n == 0)
    def _():
        reg_ref[0] = (freg_ref[0] * worig_ref[0]).astype(reg_ref.dtype)


def lwtl_residual(filt, feat, label, filter_reg, sample_weight=None):
    """Returns (data_residual, reg_residual) matching LWTLResidual.forward."""
    N, S, C, H, W = feat.shape
    S2, F, C2, kH, kW = filt.shape
    assert S2 == S and C2 == C
    # TODO(synk): even kernel sizes use the symmetric-'same' convention here;
    # pytracking/F.conv2d with padding=k//2 gives H+1 outputs for even k.
    # TODO(synk): filter_dilation_factors (dilated filters) not implemented.
    ph, pw = kH // 2, kW // 2
    Hp = H + 2 * ph
    Q = H * W
    K = kH * kW * C
    KC = C * kH * kW

    # --- layout plumbing (cheap glue; all reshapes below are contiguous) ---
    # Pad H only, flatten spatial dims, then lane-pad so every tap shift
    # dy*W + dx is a non-negative, in-range static lane offset.
    feat_hpad = jnp.pad(feat, ((0, 0), (0, 0), (0, 0), (ph, ph), (0, 0)))
    feat_flat = feat_hpad.reshape(N, S, C, Hp * W)
    need = (kH - 1) * W + (kW - 1) + Q                 # max slice end
    L = max(pw + Hp * W + pw, need)
    Lpad = ((L + 127) // 128) * 128                    # lane-align the buffer
    feat_flat = jnp.pad(
        feat_flat, ((0, 0), (0, 0), (0, 0), (pw, Lpad - Hp * W - pw)))

    label_flat = label.reshape(N, S, F, Q)             # free reshape
    # Filter in tap-major order for the single K-contraction (tiny tensor).
    w_mm = jnp.transpose(filt, (0, 1, 3, 4, 2)).reshape(S, F, K)
    # Filter in original element order for the regularization residual.
    w_orig = filt.reshape(S, F, KC)

    if sample_weight is None:
        sw = jnp.full((N,), math.sqrt(1.0 / N), jnp.float32)
    else:
        # 1-D per-image weights (view(-1,1,1,1,1) path in PyTorch).
        # TODO(synk): full-numel (per-element) sample_weight path not implemented.
        sw = jnp.asarray(sample_weight, jnp.float32).reshape(N)
    freg = jnp.asarray(filter_reg, jnp.float32).reshape(1)

    kernel = functools.partial(_lwtl_kernel, H=H, W=W, kH=kH, kW=kW, C=C)

    grid_spec = pltpu.PrefetchScalarGridSpec(
        num_scalar_prefetch=2,
        grid=(S, N),                                   # filter axis outermost
        in_specs=[
            pl.BlockSpec((1, 1, C, Lpad), lambda s, n, sw_r, fr_r: (n, s, 0, 0)),
            pl.BlockSpec((1, F, K), lambda s, n, sw_r, fr_r: (s, 0, 0)),
            pl.BlockSpec((1, F, KC), lambda s, n, sw_r, fr_r: (s, 0, 0)),
            pl.BlockSpec((1, 1, F, Q), lambda s, n, sw_r, fr_r: (n, s, 0, 0)),
        ],
        out_specs=[
            pl.BlockSpec((1, 1, F, Q), lambda s, n, sw_r, fr_r: (n, s, 0, 0)),
            pl.BlockSpec((1, F, KC), lambda s, n, sw_r, fr_r: (s, 0, 0)),
        ],
    )

    data_flat, reg3 = pl.pallas_call(
        kernel,
        grid_spec=grid_spec,
        out_shape=(
            jax.ShapeDtypeStruct((N, S, F, Q), jnp.float32),
            jax.ShapeDtypeStruct((S, F, KC), jnp.float32),
        ),
        compiler_params=pltpu.CompilerParams(
            dimension_semantics=("parallel", "arbitrary"),
            vmem_limit_bytes=32 * 1024 * 1024,
        ),
    )(sw, freg, feat_flat, w_mm, w_orig, label_flat)

    data_residual = data_flat.reshape(N, S, F, H, W)   # free reshape
    reg_residual = reg3.reshape(1, S, F * KC)          # free reshape
    return data_residual, reg_residual


def _reference(filt, feat, label, filter_reg, sample_weight=None):
    """Pure-JAX reference (same semantics) for correctness check."""
    N, S, C, H, W = feat.shape
    _, F, _, kH, kW = filt.shape
    ph, pw = kH // 2, kW // 2
    feat_cl = jnp.transpose(feat, (0, 1, 3, 4, 2))
    feat_pad = jnp.pad(feat_cl, ((0, 0), (0, 0), (ph, ph), (pw, pw), (0, 0)))
    scores = jnp.zeros((N, S, F, H, W), jnp.float32)
    for dy in range(kH):
        for dx in range(kW):
            scores = scores + jnp.einsum(
                'nshwc,scf->nsfhw',
                feat_pad[:, :, dy:dy + H, dx:dx + W, :],
                jnp.transpose(filt[:, :, :, dy, dx], (0, 2, 1)))
    if sample_weight is None:
        sw = math.sqrt(1.0 / N)
    else:
        sw = jnp.asarray(sample_weight, jnp.float32).reshape(N, 1, 1, 1, 1)
    data_res = sw * (scores - label)
    reg_res = filter_reg * filt.reshape(1, S, -1)
    return data_res, reg_res


if __name__ == "__main__":
    key = jax.random.PRNGKey(0)
    k1, k2, k3 = jax.random.split(key, 3)

    # Small shapes consistent with the module's forward.
    N, S, C, F, H, W, kH, kW = 2, 2, 8, 4, 16, 16, 3, 3

    feat = jax.random.normal(k1, (N, S, C, H, W), jnp.float32)
    filt = jax.random.normal(k2, (S, F, C, kH, kW), jnp.float32)
    label = jax.random.normal(k3, (N, S, F, H, W), jnp.float32)
    # Module parameter: filter_reg = init_filter_reg * ones(1)
    filter_reg = 0.01 * jnp.ones((1,), jnp.float32)

    # Default path (sample_weight = sqrt(1/N)).
    data_res, reg_res = lwtl_residual(filt, feat, label, filter_reg)
    jax.block_until_ready(data_res)
    jax.block_until_ready(reg_res)

    data_ref, reg_ref = _reference(filt, feat, label, filter_reg)
    assert data_res.shape == (N, S, F, H, W)
    assert reg_res.shape == (1, S, F * C * kH * kW)
    assert jnp.allclose(data_res, data_ref, atol=2e-3, rtol=2e-3), \
        float(jnp.max(jnp.abs(data_res - data_ref)))
    assert jnp.allclose(reg_res, reg_ref, atol=1e-6, rtol=1e-6)

    # 1-D per-image sample-weight path.
    sw1 = jnp.array([0.25, 1.75], jnp.float32)
    data_res_w, _ = lwtl_residual(filt, feat, label, filter_reg,
                                  sample_weight=sw1)
    jax.block_until_ready(data_res_w)
    data_ref_w, _ = _reference(filt, feat, label, filter_reg, sample_weight=sw1)
    assert jnp.allclose(data_res_w, data_ref_w, atol=2e-3, rtol=2e-3)

    print("KERNEL_OK")
</pallas_src>

<mosaic_0001>
module attributes {stable_mosaic.version = 11 : i64} {
  func.func @_lwtl_kernel(%arg0: i32, %arg1: i32, %arg2: memref<2xf32, #tpu.memory_space<smem>>, %arg3: memref<1xf32, #tpu.memory_space<smem>>, %arg4: memref<1x1x8x384xf32, #tpu.memory_space<vmem>>, %arg5: memref<1x4x72xf32, #tpu.memory_space<vmem>>, %arg6: memref<1x4x72xf32, #tpu.memory_space<vmem>>, %arg7: memref<1x1x4x256xf32, #tpu.memory_space<vmem>>, %arg8: memref<1x1x4x256xf32, #tpu.memory_space<vmem>>, %arg9: memref<1x4x72xf32, #tpu.memory_space<vmem>>) attributes {dimension_semantics = [#tpu.dimension_semantics<parallel>, #tpu.dimension_semantics<arbitrary>], iteration_bounds = array<i64: 2, 2>, scalar_prefetch = 2 : i64, scratch_operands = 0 : i64, tpu.core_type = #tpu.core_type<tc>, window_params = [{transform_indices = @transform_0, window_bounds = array<i64: 1, 1, 8, 384>}, {transform_indices = @transform_1, window_bounds = array<i64: 1, 4, 72>}, {transform_indices = @transform_2, window_bounds = array<i64: 1, 4, 72>}, {transform_indices = @transform_3, window_bounds = array<i64: 1, 1, 4, 256>}, {transform_indices = @transform_4, window_bounds = array<i64: 1, 1, 4, 256>}, {transform_indices = @transform_5, window_bounds = array<i64: 1, 4, 72>}]} {
    %c0 = arith.constant 0 : index
    %c0_0 = arith.constant 0 : index
    %c0_1 = arith.constant 0 : index
    %c0_2 = arith.constant 0 : index
    %0 = vector.load %arg4[%c0, %c0_0, %c0_1, %c0_2] : memref<1x1x8x384xf32, #tpu.memory_space<vmem>>, vector<1x1x8x384xf32>
    %1 = vector.shape_cast %0 : vector<1x1x8x384xf32> to vector<8x384xf32>
    %2 = tpu.iota {dimensions = array<i32: 1>} : vector<8x256xi32>
    %c16_i32 = arith.constant 16 : i32
    %c0_i32 = arith.constant 0 : i32
    %3 = arith.cmpi eq, %c16_i32, %c0_i32 : i32
    %c1_i32 = arith.constant 1 : i32
    %4 = arith.select %3, %c1_i32, %c16_i32 : i32
    %5 = vector.broadcast %4 : i32 to vector<8x256xi32>
    %6 = arith.remsi %2, %5 : vector<8x256xi32>
    %c0_i32_3 = arith.constant 0 : i32
    %7 = vector.broadcast %c0_i32_3 : i32 to vector<8x256xi32>
    %8 = arith.cmpi ne, %6, %7 : vector<8x256xi32>
    %c0_i32_4 = arith.constant 0 : i32
    %9 = vector.broadcast %c0_i32_4 : i32 to vector<8x256xi32>
    %10 = arith.cmpi slt, %6, %9 : vector<8x256xi32>
    %c0_i32_5 = arith.constant 0 : i32
    %11 = arith.cmpi slt, %4, %c0_i32_5 : i32
    %12 = vector.broadcast %11 : i1 to vector<8x256xi1>
    %13 = vector.broadcast %12 : vector<8x256xi1> to vector<8x256xi1>
    %14 = arith.xori %10, %13 : vector<8x256xi1>
    %15 = arith.andi %14, %8 : vector<8x256xi1>
    %16 = vector.broadcast %4 : i32 to vector<8x256xi32>
    %17 = arith.addi %6, %16 : vector<8x256xi32>
    %18 = arith.select %15, %17, %6 : vector<8x256xi1>, vector<8x256xi32>
    %19 = vector.extract_strided_slice %1 {offsets = [0, 0], sizes = [8, 256], strides = [1, 1]} : vector<8x384xf32> to vector<8x256xf32>
    %c1_i32_6 = arith.constant 1 : i32
    %20 = vector.broadcast %c1_i32_6 : i32 to vector<8x256xi32>
    %21 = arith.cmpi sge, %18, %20 : vector<8x256xi32>
    %cst = arith.constant 0.000000e+00 : f32
    %22 = vector.broadcast %cst : f32 to vector<8x256xf32>
    %23 = arith.select %21, %19, %22 : vector<8x256xi1>, vector<8x256xf32>
    %24 = vector.extract_strided_slice %1 {offsets = [0, 1], sizes = [8, 256], strides = [1, 1]} : vector<8x384xf32> to vector<8x256xf32>
    %25 = vector.extract_strided_slice %1 {offsets = [0, 2], sizes = [8, 256], strides = [1, 1]} : vector<8x384xf32> to vector<8x256xf32>
    %c15_i32 = arith.constant 15 : i32
    %26 = vector.broadcast %c15_i32 : i32 to vector<8x256xi32>
    %27 = arith.cmpi slt, %18, %26 : vector<8x256xi32>
    %cst_7 = arith.constant 0.000000e+00 : f32
    %28 = vector.broadcast %cst_7 : f32 to vector<8x256xf32>
    %29 = arith.select %27, %25, %28 : vector<8x256xi1>, vector<8x256xf32>
    %30 = vector.extract_strided_slice %1 {offsets = [0, 16], sizes = [8, 256], strides = [1, 1]} : vector<8x384xf32> to vector<8x256xf32>
    %c1_i32_8 = arith.constant 1 : i32
    %31 = vector.broadcast %c1_i32_8 : i32 to vector<8x256xi32>
    %32 = arith.cmpi sge, %18, %31 : vector<8x256xi32>
    %cst_9 = arith.constant 0.000000e+00 : f32
    %33 = vector.broadcast %cst_9 : f32 to vector<8x256xf32>
    %34 = arith.select %32, %30, %33 : vector<8x256xi1>, vector<8x256xf32>
    %35 = vector.extract_strided_slice %1 {offsets = [0, 17], sizes = [8, 256], strides = [1, 1]} : vector<8x384xf32> to vector<8x256xf32>
    %36 = vector.extract_strided_slice %1 {offsets = [0, 18], sizes = [8, 256], strides = [1, 1]} : vector<8x384xf32> to vector<8x256xf32>
    %c15_i32_10 = arith.constant 15 : i32
    %37 = vector.broadcast %c15_i32_10 : i32 to vector<8x256xi32>
    %38 = arith.cmpi slt, %18, %37 : vector<8x256xi32>
    %cst_11 = arith.constant 0.000000e+00 : f32
    %39 = vector.broadcast %cst_11 : f32 to vector<8x256xf32>
    %40 = arith.select %38, %36, %39 : vector<8x256xi1>, vector<8x256xf32>
    %41 = vector.extract_strided_slice %1 {offsets = [0, 32], sizes = [8, 256], strides = [1, 1]} : vector<8x384xf32> to vector<8x256xf32>
    %c1_i32_12 = arith.constant 1 : i32
    %42 = vector.broadcast %c1_i32_12 : i32 to vector<8x256xi32>
    %43 = arith.cmpi sge, %18, %42 : vector<8x256xi32>
    %cst_13 = arith.constant 0.000000e+00 : f32
    %44 = vector.broadcast %cst_13 : f32 to vector<8x256xf32>
    %45 = arith.select %43, %41, %44 : vector<8x256xi1>, vector<8x256xf32>
    %46 = vector.extract_strided_slice %1 {offsets = [0, 33], sizes = [8, 256], strides = [1, 1]} : vector<8x384xf32> to vector<8x256xf32>
    %47 = vector.extract_strided_slice %1 {offsets = [0, 34], sizes = [8, 256], strides = [1, 1]} : vector<8x384xf32> to vector<8x256xf32>
    %c15_i32_14 = arith.constant 15 : i32
    %48 = vector.broadcast %c15_i32_14 : i32 to vector<8x256xi32>
    %49 = arith.cmpi slt, %18, %48 : vector<8x256xi32>
    %cst_15 = arith.constant 0.000000e+00 : f32
    %50 = vector.broadcast %cst_15 : f32 to vector<8x256xf32>
    %51 = arith.select %49, %47, %50 : vector<8x256xi1>, vector<8x256xf32>
    %52 = tpu.concatenate %23, %24, %29, %34, %35, %40, %45, %46, %51 in 0 : vector<8x256xf32>, vector<8x256xf32>, vector<8x256xf32>, vector<8x256xf32>, vector<8x256xf32>, vector<8x256xf32>, vector<8x256xf32>, vector<8x256xf32>, vector<8x256xf32> -> vector<72x256xf32>
    %c0_16 = arith.constant 0 : index
    %c0_17 = arith.constant 0 : index
    %c0_18 = arith.constant 0 : index
    %53 = vector.load %arg5[%c0_16, %c0_17, %c0_18] : memref<1x4x72xf32, #tpu.memory_space<vmem>>, vector<1x4x72xf32>
    %54 = vector.shape_cast %53 : vector<1x4x72xf32> to vector<4x72xf32>
    %cst_19 = arith.constant dense<0.000000e+00> : vector<4x256xf32>
    %55 = tpu.matmul %54, %52, %cst_19 {dimension_numbers = #tpu.dot_dimension_numbers<[1], [0], [0], [1], [0, 0, 1, 1], [], []>} : vector<4x72xf32>, vector<72x256xf32>, vector<4x256xf32> -> vector<4x256xf32>
    %56 = arith.index_cast %arg1 : i32 to index
    %57 = memref.load %arg2[%56] : memref<2xf32, #tpu.memory_space<smem>>
    %c0_20 = arith.constant 0 : index
    %c0_21 = arith.constant 0 : index
    %c0_22 = arith.constant 0 : index
    %c0_23 = arith.constant 0 : index
    %58 = vector.load %arg7[%c0_20, %c0_21, %c0_22, %c0_23] : memref<1x1x4x256xf32, #tpu.memory_space<vmem>>, vector<1x1x4x256xf32>
    %59 = vector.shape_cast %58 : vector<1x1x4x256xf32> to vector<4x256xf32>
    %60 = arith.subf %55, %59 : vector<4x256xf32>
    %61 = vector.broadcast %57 : f32 to vector<4x256xf32>
    %62 = arith.mulf %61, %60 : vector<4x256xf32>
    %c0_24 = arith.constant 0 : index
    %c0_25 = arith.constant 0 : index
    %c0_26 = arith.constant 0 : index
    %c0_27 = arith.constant 0 : index
    %63 = vector.load %arg8[%c0_24, %c0_25, %c0_26, %c0_27] : memref<1x1x4x256xf32, #tpu.memory_space<vmem>>, vector<1x1x4x256xf32>
    %64 = vector.shape_cast %63 : vector<1x1x4x256xf32> to vector<4x256xf32>
    %65 = vector.shape_cast %62 : vector<4x256xf32> to vector<1x1x4x256xf32>
    tpu.vector_store %arg8[%c0_24, %c0_25, %c0_26, %c0_27], %65 {strides = array<i32>} : memref<1x1x4x256xf32, #tpu.memory_space<vmem>>, vector<1x1x4x256xf32>,
    %c0_i32_28 = arith.constant 0 : i32
    %66 = arith.cmpi eq, %arg1, %c0_i32_28 : i32
    %67 = arith.extui %66 : i1 to i32
    %c0_i32_29 = arith.constant 0 : i32
    %68 = arith.cmpi ne, %67, %c0_i32_29 : i32
    scf.if %68 {
      %c0_30 = arith.constant 0 : index
      %69 = memref.load %arg3[%c0_30] : memref<1xf32, #tpu.memory_space<smem>>
      %c0_31 = arith.constant 0 : index
      %c0_32 = arith.constant 0 : index
      %c0_33 = arith.constant 0 : index
      %70 = vector.load %arg6[%c0_31, %c0_32, %c0_33] : memref<1x4x72xf32, #tpu.memory_space<vmem>>, vector<1x4x72xf32>
      %71 = vector.shape_cast %70 : vector<1x4x72xf32> to vector<4x72xf32>
      %72 = vector.broadcast %69 : f32 to vector<4x72xf32>
      %73 = arith.mulf %72, %71 : vector<4x72xf32>
      %c0_34 = arith.constant 0 : index
      %c0_35 = arith.constant 0 : index
      %c0_36 = arith.constant 0 : index
      %74 = vector.load %arg9[%c0_34, %c0_35, %c0_36] : memref<1x4x72xf32, #tpu.memory_space<vmem>>, vector<1x4x72xf32>
      %75 = vector.shape_cast %74 : vector<1x4x72xf32> to vector<4x72xf32>
      %76 = vector.shape_cast %73 : vector<4x72xf32> to vector<1x4x72xf32>
      tpu.vector_store %arg9[%c0_34, %c0_35, %c0_36], %76 {strides = array<i32>} : memref<1x4x72xf32, #tpu.memory_space<vmem>>, vector<1x4x72xf32>,
    } else {
    }
    return
  }
  func.func @transform_0(%arg0: i32, %arg1: i32, %arg2: memref<2xf32, #tpu.memory_space<smem>>, %arg3: memref<1xf32, #tpu.memory_space<smem>>) -> (i32, i32, i32, i32) {
    %c0_i32 = arith.constant 0 : i32
    %c0_i32_0 = arith.constant 0 : i32
    %c0_i32_1 = arith.constant 0 : i32
    return %arg1, %arg0, %c0_i32, %c0_i32_0 : i32, i32, i32, i32
  }
  func.func @transform_1(%arg0: i32, %arg1: i32, %arg2: memref<2xf32, #tpu.memory_space<smem>>, %arg3: memref<1xf32, #tpu.memory_space<smem>>) -> (i32, i32, i32) {
    %c0_i32 = arith.constant 0 : i32
    %c0_i32_0 = arith.constant 0 : i32
    %c0_i32_1 = arith.constant 0 : i32
    return %arg0, %c0_i32, %c0_i32_0 : i32, i32, i32
  }
  func.func @transform_2(%arg0: i32, %arg1: i32, %arg2: memref<2xf32, #tpu.memory_space<smem>>, %arg3: memref<1xf32, #tpu.memory_space<smem>>) -> (i32, i32, i32) {
    %c0_i32 = arith.constant 0 : i32
    %c0_i32_0 = arith.constant 0 : i32
    %c0_i32_1 = arith.constant 0 : i32
    return %arg0, %c0_i32, %c0_i32_0 : i32, i32, i32
  }
  func.func @transform_3(%arg0: i32, %arg1: i32, %arg2: memref<2xf32, #tpu.memory_space<smem>>, %arg3: memref<1xf32, #tpu.memory_space<smem>>) -> (i32, i32, i32, i32) {
    %c0_i32 = arith.constant 0 : i32
    %c0_i32_0 = arith.constant 0 : i32
    %c0_i32_1 = arith.constant 0 : i32
    return %arg1, %arg0, %c0_i32, %c0_i32_0 : i32, i32, i32, i32
  }
  func.func @transform_4(%arg0: i32, %arg1: i32, %arg2: memref<2xf32, #tpu.memory_space<smem>>, %arg3: memref<1xf32, #tpu.memory_space<smem>>) -> (i32, i32, i32, i32) {
    %c0_i32 = arith.constant 0 : i32
    %c0_i32_0 = arith.constant 0 : i32
    %c0_i32_1 = arith.constant 0 : i32
    return %arg1, %arg0, %c0_i32, %c0_i32_0 : i32, i32, i32, i32
  }
  func.func @transform_5(%arg0: i32, %arg1: i32, %arg2: memref<2xf32, #tpu.memory_space<smem>>, %arg3: memref<1xf32, #tpu.memory_space<smem>>) -> (i32, i32, i32) {
    %c0_i32 = arith.constant 0 : i32
    %c0_i32_0 = arith.constant 0 : i32
    %c0_i32_1 = arith.constant 0 : i32
    return %arg0, %c0_i32, %c0_i32_0 : i32, i32, i32
  }
}

</mosaic_0001>

<llo_original>
// kernel: tpu_custom_call.1
$region0: #{tpu_custom_call.1}
  #allocation0 [shape = 'u32[]', space=smem, size = 0x4, offset = 0x4, fixed_abs, tag = 'smem constant byte address 0x4 - core index']
  #allocation1 [shape = 'u32[144,128]{1,0:T(1,128)}', space=vmem, size = 0x12000, scoped, tag = 'internal scratch']
  #allocation2 [shape = 's32[1]{0}', space=sflag, size = 0x4, scoped, tag = 'scoped memory for tpu_custom_call.1']
  #allocation3 [shape = 'u8[512]{0}', space=smem, size = 0x200, scoped, tag = 'prefetched SMEM operand 0']
  #allocation4 [shape = 'f32[1]{0:T(128)S(6)}', space=smem, size = 0x200, scoped, tag = 'prefetched SMEM operand 1']
  %s0 = inlined_call_operand.vmem [shape: f32[2], index: 0, kind: input, shape index: {}]
  %s1 = inlined_call_operand.<no memory space> [shape: f32[1], index: 1, kind: input, shape index: {}]
  %s2 = inlined_call_operand.hbm [shape: f32[2,2,8,384], index: 2, kind: input, shape index: {}]
  %s3 = inlined_call_operand.hbm [shape: f32[2,4,72], index: 3, kind: input, shape index: {}]
  %s4 = inlined_call_operand.hbm [shape: f32[2,4,72], index: 4, kind: input, shape index: {}]
  %s5 = inlined_call_operand.hbm [shape: f32[2,2,4,256], index: 5, kind: input, shape index: {}]
  %s6 = inlined_call_operand.hbm [shape: f32[2,2,4,256], index: 6, kind: output, shape index: {0}]
  %s7 = inlined_call_operand.hbm [shape: f32[2,4,72], index: 7, kind: output, shape index: {1}]
  %8 = xla_tuple %s6, %s7
  %s9 = sld [smem:[#allocation0]]
  $region77: #{tpu_custom_call.1} parent=0
    _
  %s11 = ssub.s32 1, %s9
  %s12 = scalar_select 0, %s11, %s9
  %s13 = sshll.u32 %s0, 4
  %s14 = int_to_ptr.vmem [resolvable:$true] %s13
  %16 = dma.vmem_to_smem %s14, 16, [#allocation3], [#allocation2]
  %17 = sst [smem:[#allocation4]] %s1
  %18 = dma.done [#allocation2], 16
  %19 = sfence
  $region1: #{tpu_custom_call.1} parent=0
    #allocation5 [shape = 'u8[24576]{0}', space=vmem, size = 0x6000, scoped, tag = 'input window, operand 2']
    #allocation6 [shape = 's32[2]{0}', space=sflag, size = 0x8, scoped, tag = 'scoped memory for tpu_custom_call.1']
    #allocation7 [shape = 's32[2]{0}', space=sflag, size = 0x8, scoped, tag = 'scoped memory for tpu_custom_call.1']
    #allocation8 [shape = 'u8[4096]{0}', space=vmem, size = 0x1000, scoped, tag = 'input window, operand 3']
    #allocation9 [shape = 's32[2]{0}', space=sflag, size = 0x8, scoped, tag = 'scoped memory for tpu_custom_call.1']
    #allocation10 [shape = 'u8[4096]{0}', space=vmem, size = 0x1000, scoped, tag = 'input window, operand 4']
    #allocation11 [shape = 'u8[8192]{0}', space=vmem, size = 0x2000, scoped, tag = 'input window, operand 5']
    #allocation12 [shape = 's32[2]{0}', space=sflag, size = 0x8, scoped, tag = 'scoped memory for tpu_custom_call.1']
    #allocation13 [shape = 'u8[8192]{0}', space=vmem, size = 0x2000, scoped, tag = 'output window, operand 0']
    #allocation14 [shape = 'u8[4096]{0}', space=vmem, size = 0x1000, scoped, tag = 'output window, operand 1']
    #allocation15 [shape = 's32[2]{0}', space=sflag, size = 0x8, scoped, tag = 'scoped memory for tpu_custom_call.1']
    %20 = vsyncpa [#allocation6], 0
    %s21 = scalar_lea.sflag [#allocation6], 1
    %22 = vsyncpa %s21, 0
    %23 = vsyncpa [#allocation9], 0
    %s24 = scalar_lea.sflag [#allocation9], 1
    %25 = vsyncpa %s24, 0
    %26 = vsyncpa [#allocation12], 0
    %s27 = scalar_lea.sflag [#allocation12], 1
    %28 = vsyncpa %s27, 0
    %29 = vsyncpa [#allocation7], 0
    %s30 = scalar_lea.sflag [#allocation7], 1
    %31 = vsyncpa %s30, 0
    %32 = vsyncpa [#allocation15], 0
    %s33 = scalar_lea.sflag [#allocation15], 1
    %34 = vsyncpa %s33, 0
    loop: start=0, step=1, limit=6
    $region2: #{tpu_custom_call.1} parent=1 // loop_pre_header
      _
    $region3: #{tpu_custom_call.1} parent=1 // loop_header
      %s36 = sphi 0, %s40
      %p37 = scmp.ge.s32.totalorder %s36, 6
      %s43 = sphi 0, %s55
      %s44 = sphi 0, %s51
      %s45 = sphi 0, %s43
      %s46 = sphi 0, %s44
      %s47 = sphi 0, %s45
      %s48 = sphi 0, %s46
      %s60 = sphi 0, %s62
      %s63 = sphi 0, %s60
      %s64 = sphi 0, %s63
      %s80 = sphi 0, %s64
      %s86 = sphi 0, %s88
      %s89 = sphi 0, %s86
      %s90 = sphi 0, %s89
      %s106 = sphi 0, %s90
      %s112 = sphi 0, %s114
      %s115 = sphi 0, %s112
      %s116 = sphi 0, %s115
      %s132 = sphi 0, %s116
      %s140 = sphi 0, %s142
      %s143 = sphi 0, %s140
      %s144 = sphi 0, %s143
      %s160 = sphi 0, %s144
      %s168 = sphi 0, %s170
      %s171 = sphi 0, %s168
      %s172 = sphi 0, %s171
      %s188 = sphi 0, %s172
      %s194 = sphi 0, %s196
      %s197 = sphi 0, %s194
      %s198 = sphi 0, %s197
      %s214 = sphi 0, %s198
    $region4: #{tpu_custom_call.1} parent=1 // loop_header_branch
      %39 = sbr.rel (%p37) target = $region8
    $region5: #{tpu_custom_call.1} parent=1 // loop_body
      %s41 = ssub.s32 %s36, 1
      %s42 = ssub.s32 %s36, 2
      %s49 = sadd.s32 1, %s44
      %p50 = scmp.ge.s32.totalorder %s49, 2
      %s51 = scalar_select %p50, 0, %s49
      %s52 = sadd.s32 1, %s43
      %s53 = scalar_select %p50, %s52, %s43
      %p54 = scmp.ge.s32.totalorder %s53, 2
      %s55 = scalar_select %p54, 0, %s53
      %s56 = ssub.s32 %s44, %s51
      %s57 = ssub.s32 %s43, %s55
      %s58 = sor.u32 %s56, %s57
      %p59 = scmp.eq.s32.totalorder %s58, 0
      %s61 = sadd.s32 %s60, 1
      %s62 = scalar_select %p59, %s60, %s61
      %p65 = pneg %p59
      %p66 = scmp.eq.s32.totalorder %s36, 3
      %p67 = por %p65, %p66
      %p68 = scmp.ne.s32.totalorder %s60, %s63
      %p69 = scmp.eq.s32.totalorder %s36, 0
      %p70 = por %p68, %p69
      %p71 = scmp.ne.s32.totalorder %s60, %s63
      %p72 = scmp.eq.s32.totalorder %s41, 3
      %p73 = por %p71, %p72
      %p74 = scmp.ne.s32.totalorder %s63, %s64
      %p75 = scmp.eq.s32.totalorder %s41, 0
      %p76 = por %p74, %p75
      %p77 = scmp.ne.s32.totalorder %s63, %s64
      %p78 = scmp.eq.s32.totalorder %s42, 3
      %p79 = por %p77, %p78
      %p81 = scmp.ne.s32.totalorder %s64, %s80
      %p82 = scmp.eq.s32.totalorder %s42, 0
      %p83 = por %p81, %p82
      %s84 = ssub.s32 %s43, %s55
      %p85 = scmp.eq.s32.totalorder %s84, 0
      %s87 = sadd.s32 %s86, 1
      %s88 = scalar_select %p85, %s86, %s87
      %p91 = pneg %p85
      %p92 = scmp.eq.s32.totalorder %s36, 3
      %p93 = por %p91, %p92
      %p94 = scmp.ne.s32.totalorder %s86, %s89
      %p95 = scmp.eq.s32.totalorder %s36, 0
      %p96 = por %p94, %p95
      %p97 = scmp.ne.s32.totalorder %s86, %s89
      %p98 = scmp.eq.s32.totalorder %s41, 3
      %p99 = por %p97, %p98
      %p100 = scmp.ne.s32.totalorder %s89, %s90
      %p101 = scmp.eq.s32.totalorder %s41, 0
      %p102 = por %p100, %p101
      %p103 = scmp.ne.s32.totalorder %s89, %s90
      %p104 = scmp.eq.s32.totalorder %s42, 3
      %p105 = por %p103, %p104
      %p107 = scmp.ne.s32.totalorder %s90, %s106
      %p108 = scmp.eq.s32.totalorder %s42, 0
      %p109 = por %p107, %p108
      %s110 = ssub.s32 %s43, %s55
      %p111 = scmp.eq.s32.totalorder %s110, 0
      %s113 = sadd.s32 %s112, 1
      %s114 = scalar_select %p111, %s112, %s113
      %p117 = pneg %p111
      %p118 = scmp.eq.s32.totalorder %s36, 3
      %p119 = por %p117, %p118
      %p120 = scmp.ne.s32.totalorder %s112, %s115
      %p121 = scmp.eq.s32.totalorder %s36, 0
      %p122 = por %p120, %p121
      %p123 = scmp.ne.s32.totalorder %s112, %s115
      %p124 = scmp.eq.s32.totalorder %s41, 3
      %p125 = por %p123, %p124
      %p126 = scmp.ne.s32.totalorder %s115, %s116
      %p127 = scmp.eq.s32.totalorder %s41, 0
      %p128 = por %p126, %p127
      %p129 = scmp.ne.s32.totalorder %s115, %s116
      %p130 = scmp.eq.s32.totalorder %s42, 3
      %p131 = por %p129, %p130
      %p133 = scmp.ne.s32.totalorder %s116, %s132
      %p134 = scmp.eq.s32.totalorder %s42, 0
      %p135 = por %p133, %p134
      %s136 = ssub.s32 %s44, %s51
      %s137 = ssub.s32 %s43, %s55
      %s138 = sor.u32 %s136, %s137
      %p139 = scmp.eq.s32.totalorder %s138, 0
      %s141 = sadd.s32 %s140, 1
      %s142 = scalar_select %p139, %s140, %s141
      %p145 = pneg %p139
      %p146 = scmp.eq.s32.totalorder %s36, 3
      %p147 = por %p145, %p146
      %p148 = scmp.ne.s32.totalorder %s140, %s143
      %p149 = scmp.eq.s32.totalorder %s36, 0
      %p150 = por %p148, %p149
      %p151 = scmp.ne.s32.totalorder %s140, %s143
      %p152 = scmp.eq.s32.totalorder %s41, 3
      %p153 = por %p151, %p152
      %p154 = scmp.ne.s32.totalorder %s143, %s144
      %p155 = scmp.eq.s32.totalorder %s41, 0
      %p156 = por %p154, %p155
      %p157 = scmp.ne.s32.totalorder %s143, %s144
      %p158 = scmp.eq.s32.totalorder %s42, 3
      %p159 = por %p157, %p158
      %p161 = scmp.ne.s32.totalorder %s144, %s160
      %p162 = scmp.eq.s32.totalorder %s42, 0
      %p163 = por %p161, %p162
      %s164 = ssub.s32 %s44, %s51
      %s165 = ssub.s32 %s43, %s55
      %s166 = sor.u32 %s164, %s165
      %p167 = scmp.eq.s32.totalorder %s166, 0
      %s169 = sadd.s32 %s168, 1
      %s170 = scalar_select %p167, %s168, %s169
      %p173 = pneg %p167
      %p174 = scmp.eq.s32.totalorder %s36, 3
      %p175 = por %p173, %p174
      %p176 = scmp.ne.s32.totalorder %s168, %s171
      %p177 = scmp.eq.s32.totalorder %s36, 0
      %p178 = por %p176, %p177
      %p179 = scmp.ne.s32.totalorder %s168, %s171
      %p180 = scmp.eq.s32.totalorder %s41, 3
      %p181 = por %p179, %p180
      %p182 = scmp.ne.s32.totalorder %s171, %s172
      %p183 = scmp.eq.s32.totalorder %s41, 0
      %p184 = por %p182, %p183
      %p185 = scmp.ne.s32.totalorder %s171, %s172
      %p186 = scmp.eq.s32.totalorder %s42, 3
      %p187 = por %p185, %p186
      %p189 = scmp.ne.s32.totalorder %s172, %s188
      %p190 = scmp.eq.s32.totalorder %s42, 0
      %p191 = por %p189, %p190
      %s192 = ssub.s32 %s43, %s55
      %p193 = scmp.eq.s32.totalorder %s192, 0
      %s195 = sadd.s32 %s194, 1
      %s196 = scalar_select %p193, %s194, %s195
      %p199 = pneg %p193
      %p200 = scmp.eq.s32.totalorder %s36, 3
      %p201 = por %p199, %p200
      %p202 = scmp.ne.s32.totalorder %s194, %s197
      %p203 = scmp.eq.s32.totalorder %s36, 0
      %p204 = por %p202, %p203
      %p205 = scmp.ne.s32.totalorder %s194, %s197
      %p206 = scmp.eq.s32.totalorder %s41, 3
      %p207 = por %p205, %p206
      %p208 = scmp.ne.s32.totalorder %s197, %s198
      %p209 = scmp.eq.s32.totalorder %s41, 0
      %p210 = por %p208, %p209
      %p211 = scmp.ne.s32.totalorder %s197, %s198
      %p212 = scmp.eq.s32.totalorder %s42, 3
      %p213 = por %p211, %p212
      %p215 = scmp.ne.s32.totalorder %s198, %s214
      %p216 = scmp.eq.s32.totalorder %s42, 0
      %p217 = por %p215, %p216
      %p218 = scmp.le.s32.totalorder 1, %s36
      %p219 = scmp.lt.s32.totalorder %s36, 5
      %p220 = pnand %p218, %p219
      %p221 = pneg %p220
      // Predicated region
      $region9: #{tpu_custom_call.1} parent=5 // pred_check
        _
      $region10: #{tpu_custom_call.1} parent=5 // pred_check_branch
        %223 = sbr.rel (%p220) target = $region12
      $region11: #{tpu_custom_call.1} parent=5 // pred_region
        %s224 = ssub.s32 %s36, 1
      $region12: #{tpu_custom_call.1} parent=5 // pred_fallthru
        _
      %p225 = scmp.lt.s32.totalorder %s36, 4
      // Predicated region
      $region13: #{tpu_custom_call.1} parent=5 // pred_check
        %p226 = pneg %p225
      $region14: #{tpu_custom_call.1} parent=5 // pred_check_branch
        %228 = sbr.rel (%p226) target = $region16
      $region15: #{tpu_custom_call.1} parent=5 // pred_region
        // Predicated region
        $region17: #{tpu_custom_call.1} parent=15 // pred_check
          %p229 = pneg %p70
        $region18: #{tpu_custom_call.1} parent=15 // pred_check_branch
          %231 = sbr.rel (%p229) target = $region20
        $region19: #{tpu_custom_call.1} parent=15 // pred_region
          %s232 = sand.u32 %s60, 1
          %s233 = scalar_lea.sflag [#allocation6], %s232
          %s234 = sand.u32 %s60, 1
          %s235 = smul.addr %s234, 24
          %s236 = scalar_lea.vmem [#allocation5], %s235
          %s238 = ssub.s32 384, 384
          %239 = vsyncadd %s233, %s238
          %s240 = smul.addr %s43, 3
          %s241 = smul.addr %s44, 6
          %s242 = sadd.s32 %s240, %s241
          %s243 = smul.addr %s242, 128
          %s244 = scalar_lea.hbm %s2, %s243
          %s246 = sshll.u32 %s236, 4
          %s247 = int_to_ptr.vmem [resolvable:$true] %s246
          %249 = dma.hbm_to_vmem [thread:$0]  %s244, 384, %s247, %s233
        $region20: #{tpu_custom_call.1} parent=15 // pred_fallthru
          _
        // Predicated region
        $region21: #{tpu_custom_call.1} parent=15 // pred_check
          %p250 = pneg %p96
        $region22: #{tpu_custom_call.1} parent=15 // pred_check_branch
          %252 = sbr.rel (%p250) target = $region24
        $region23: #{tpu_custom_call.1} parent=15 // pred_region
          %s253 = sand.u32 %s36, 1
          %s254 = scalar_lea.sflag [#allocation9], %s253
          %s255 = sand.u32 %s86, 1
          %s256 = smul.addr %s255, 4
          %s257 = scalar_lea.vmem [#allocation8], %s256
          %s259 = ssub.s32 64, 64
          %260 = vsyncadd %s254, %s259
          %s261 = smul.addr %s43, 64
          %s262 = scalar_lea.hbm %s3, %s261
          %s264 = sshll.u32 %s257, 4
          %s265 = int_to_ptr.vmem [resolvable:$true] %s264
          %267 = dma.hbm_to_vmem [thread:$0]  %s262, 64, %s265, %s254
        $region24: #{tpu_custom_call.1} parent=15 // pred_fallthru
          _
        // Predicated region
        $region25: #{tpu_custom_call.1} parent=15 // pred_check
          %p268 = pneg %p122
        $region26: #{tpu_custom_call.1} parent=15 // pred_check_branch
          %270 = sbr.rel (%p268) target = $region28
        $region27: #{tpu_custom_call.1} parent=15 // pred_region
          %s271 = sand.u32 %s36, 1
          %s272 = scalar_lea.sflag [#allocation9], %s271
          %s273 = sand.u32 %s112, 1
          %s274 = smul.addr %s273, 4
          %s275 = scalar_lea.vmem [#allocation10], %s274
          %s277 = ssub.s32 64, 64
          %278 = vsyncadd %s272, %s277
          %s279 = smul.addr %s43, 64
          %s280 = scalar_lea.hbm %s4, %s279
          %s282 = sshll.u32 %s275, 4
          %s283 = int_to_ptr.vmem [resolvable:$true] %s282
          %285 = dma.hbm_to_vmem [thread:$0]  %s280, 64, %s283, %s272
        $region28: #{tpu_custom_call.1} parent=15 // pred_fallthru
          _
        // Predicated region
        $region29: #{tpu_custom_call.1} parent=15 // pred_check
          %p286 = pneg %p150
        $region30: #{tpu_custom_call.1} parent=15 // pred_check_branch
          %288 = sbr.rel (%p286) target = $region32
        $region31: #{tpu_custom_call.1} parent=15 // pred_region
          %s289 = sand.u32 %s140, 1
          %s290 = scalar_lea.sflag [#allocation12], %s289
          %s291 = sand.u32 %s140, 1
          %s292 = smul.addr %s291, 8
          %s293 = scalar_lea.vmem [#allocation11], %s292
          %s295 = ssub.s32 128, 128
          %296 = vsyncadd %s290, %s295
          %s297 = smul.addr %s43, 2
          %s298 = smul.addr %s44, 4
          %s299 = sadd.s32 %s297, %s298
          %s300 = smul.addr %s299, 64
          %s301 = scalar_lea.hbm %s5, %s300
          %s303 = sshll.u32 %s293, 4
          %s304 = int_to_ptr.vmem [resolvable:$true] %s303
          %306 = dma.hbm_to_vmem [thread:$0]  %s301, 128, %s304, %s290
        $region32: #{tpu_custom_call.1} parent=15 // pred_fallthru
          _
      $region16: #{tpu_custom_call.1} parent=5 // pred_fallthru
        _
      %p307 = scmp.le.s32.totalorder 1, %s36
      %p308 = scmp.lt.s32.totalorder %s36, 5
      %p309 = pnand %p307, %p308
      %p310 = pneg %p309
      // Predicated region
      $region33: #{tpu_custom_call.1} parent=5 // pred_check
        _
      $region34: #{tpu_custom_call.1} parent=5 // pred_check_branch
        %312 = sbr.rel (%p309) target = $region36
      $region35: #{tpu_custom_call.1} parent=5 // pred_region
        %s313 = ssub.s32 %s36, 1
        %s314 = sand.u32 %s63, 1
        %s315 = scalar_lea.sflag [#allocation6], %s314
        %s316 = sand.u32 %s63, 1
        %s317 = smul.addr %s316, 24
        %s318 = scalar_lea.vmem [#allocation5], %s317
        // Predicated region
        $region37: #{tpu_custom_call.1} parent=35 // pred_check
          %p319 = pneg %p76
        $region38: #{tpu_custom_call.1} parent=35 // pred_check_branch
          %321 = sbr.rel (%p319) target = $region40
        $region39: #{tpu_custom_call.1} parent=35 // pred_region
          %322 = dma.done %s315, 384
        $region40: #{tpu_custom_call.1} parent=35 // pred_fallthru
          _
        %s323 = sand.u32 %s41, 1
        %s324 = scalar_lea.sflag [#allocation9], %s323
        %s325 = sand.u32 %s89, 1
        %s326 = smul.addr %s325, 4
        %s327 = scalar_lea.vmem [#allocation8], %s326
        // Predicated region
        $region41: #{tpu_custom_call.1} parent=35 // pred_check
          %p328 = pneg %p102
        $region42: #{tpu_custom_call.1} parent=35 // pred_check_branch
          %330 = sbr.rel (%p328) target = $region44
        $region43: #{tpu_custom_call.1} parent=35 // pred_region
          %331 = dma.done %s324, 64
        $region44: #{tpu_custom_call.1} parent=35 // pred_fallthru
          _
        %s332 = sand.u32 %s41, 1
        %s333 = scalar_lea.sflag [#allocation9], %s332
        %s334 = sand.u32 %s115, 1
        %s335 = smul.addr %s334, 4
        %s336 = scalar_lea.vmem [#allocation10], %s335
        // Predicated region
        $region45: #{tpu_custom_call.1} parent=35 // pred_check
          %p337 = pneg %p128
        $region46: #{tpu_custom_call.1} parent=35 // pred_check_branch
          %339 = sbr.rel (%p337) target = $region48
        $region47: #{tpu_custom_call.1} parent=35 // pred_region
          %340 = dma.done %s333, 64
        $region48: #{tpu_custom_call.1} parent=35 // pred_fallthru
          _
        %s341 = sand.u32 %s143, 1
        %s342 = scalar_lea.sflag [#allocation12], %s341
        %s343 = sand.u32 %s143, 1
        %s344 = smul.addr %s343, 8
        %s345 = scalar_lea.vmem [#allocation11], %s344
        // Predicated region
        $region49: #{tpu_custom_call.1} parent=35 // pred_check
          %p346 = pneg %p156
        $region50: #{tpu_custom_call.1} parent=35 // pred_check_branch
          %348 = sbr.rel (%p346) target = $region52
        $region51: #{tpu_custom_call.1} parent=35 // pred_region
          %349 = dma.done %s342, 128
        $region52: #{tpu_custom_call.1} parent=35 // pred_fallthru
          _
        %s350 = sand.u32 %s63, 1
        %s351 = scalar_lea.sflag [#allocation6], %s350
        %s352 = sand.u32 %s63, 1
        %s353 = smul.addr %s352, 24
        %s354 = scalar_lea.vmem [#allocation5], %s353
        %p355 = pneg %p76
        %p356 = pneg %p73
        %s357 = sand.u32 %s41, 1
        %s358 = scalar_lea.sflag [#allocation9], %s357
        %s359 = sand.u32 %s89, 1
        %s360 = smul.addr %s359, 4
        %s361 = scalar_lea.vmem [#allocation8], %s360
        %p362 = pneg %p102
        %p363 = pneg %p99
        %s364 = sand.u32 %s41, 1
        %s365 = scalar_lea.sflag [#allocation9], %s364
        %s366 = sand.u32 %s115, 1
        %s367 = smul.addr %s366, 4
        %s368 = scalar_lea.vmem [#allocation10], %s367
        %p369 = pneg %p128
        %p370 = pneg %p125
        %s371 = sand.u32 %s143, 1
        %s372 = scalar_lea.sflag [#allocation12], %s371
        %s373 = sand.u32 %s143, 1
        %s374 = smul.addr %s373, 8
        %s375 = scalar_lea.vmem [#allocation11], %s374
        %p376 = pneg %p156
        %p377 = pneg %p153
        %p378 = pneg %p184
        %p379 = pneg %p181
        %s380 = sand.u32 %s171, 1
        %s381 = scalar_lea.sflag [#allocation7], %s380
        %s382 = sand.u32 %s171, 1
        %s383 = smul.addr %s382, 8
        %s384 = scalar_lea.vmem [#allocation13], %s383
        %p385 = pneg %p210
        %p386 = pneg %p207
        %s387 = sand.u32 %s197, 1
        %s388 = scalar_lea.sflag [#allocation15], %s387
        %s389 = sand.u32 %s197, 1
        %s390 = smul.addr %s389, 4
        %s391 = scalar_lea.vmem [#allocation14], %s390
        %v392 = vld [vmem:[%s318] sm:$0xff]
        %v393 = vld [vmem:[%s318 + $0x8] sm:$0xff]
        %v394 = vld [vmem:[%s318 + $0x10] sm:$0xff]
        %v395 = vlaneseq
        %v396 = vand.u32 %v395, 127
        %v397 = vadd.s32 %v396, 128
        %vm398 = vcmp.lt.s32.totalorder %v396, 0
        %v399 = vsub.s32 0, %v396
        %v400 = vsel %vm398, %v399, %v396
        %v401 = vshrl.u32 %v400, 4
        %v402 = vand.u32 %v400, 15
        %v403 = vsub.s32 0, %v402
        %v404 = vsel %vm398, %v403, %v402
        %vm405 = vcmp.lt.s32.totalorder %v397, 0
        %v406 = vsub.s32 0, %v397
        %v407 = vsel %vm405, %v406, %v397
        %v408 = vshrl.u32 %v407, 4
        %v409 = vand.u32 %v407, 15
        %v410 = vsub.s32 0, %v409
        %v411 = vsel %vm405, %v410, %v409
        %vm412 = vcmp.ne.s32.totalorder %v404, 0
        %vm413 = vcmp.ne.s32.totalorder %v411, 0
        %vm414 = vcmp.lt.s32.totalorder %v404, 0
        %vm415 = vcmp.lt.s32.totalorder %v411, 0
        %vm416 = vmand %vm414, %vm412
        %vm417 = vmand %vm415, %vm413
        %v418 = vadd.s32 %v404, 16
        %v419 = vadd.s32 %v411, 16
        %v420 = vsel %vm416, %v418, %v404
        %v421 = vsel %vm417, %v419, %v411
        %vm422 = vcmp.ge.s32.totalorder %v420, 1
        %vm423 = vcmp.ge.s32.totalorder %v421, 1
        %v424 = vsel %vm422, %v392, 0.0
        %v425 = vsel %vm423, %v393, 0.0
        %vm426 = vcmp.lt.s32.totalorder %v420, 15
        %vm427 = vcmp.lt.s32.totalorder %v421, 15
        %431 = vrot.lane.b32.xlu0 %v392, 126
        %v432 = vpop.permute.xlu0 %431
        %433 = vrot.lane.b32.xlu0 %v393, 126
        %v434 = vpop.permute.xlu0 %433
        %435 = vrot.lane.b32.xlu0 %v394, 126
        %v436 = vpop.permute.xlu0 %435
        %vm437 = vcmask 1031168
        %v438 = vsel %vm437, %v432, %v434
        %v439 = vsel %vm437, %v434, %v436
        %v442 = vsel %vm426, %v438, 0.0
        %v443 = vsel %vm427, %v439, 0.0
        %444 = vrot.lane.b32.xlu0 %v392, 112
        %v445 = vpop.permute.xlu0 %444
        %446 = vrot.lane.b32.xlu0 %v393, 112
        %v447 = vpop.permute.xlu0 %446
        %448 = vrot.lane.b32.xlu0 %v394, 112
        %v449 = vpop.permute.xlu0 %448
        %vm450 = vcmask 916480
        %v451 = vsel %vm450, %v445, %v447
        %v452 = vsel %vm450, %v447, %v449
        %v455 = vsel %vm422, %v451, 0.0
        %v456 = vsel %vm423, %v452, 0.0
        %457 = vrot.lane.b32.xlu0 %v392, 110
        %v458 = vpop.permute.xlu0 %457
        %459 = vrot.lane.b32.xlu0 %v393, 110
        %v460 = vpop.permute.xlu0 %459
        %461 = vrot.lane.b32.xlu0 %v394, 110
        %v462 = vpop.permute.xlu0 %461
        %vm463 = vcmask 900096
        %v464 = vsel %vm463, %v458, %v460
        %v465 = vsel %vm463, %v460, %v462
        %v468 = vsel %vm426, %v464, 0.0
        %v469 = vsel %vm427, %v465, 0.0
        %470 = vrot.lane.b32.xlu0 %v392, 96
        %v471 = vpop.permute.xlu0 %470
        %472 = vrot.lane.b32.xlu0 %v393, 96
        %v473 = vpop.permute.xlu0 %472
        %474 = vrot.lane.b32.xlu0 %v394, 96
        %v475 = vpop.permute.xlu0 %474
        %vm476 = vcmask 785408
        %v477 = vsel %vm476, %v471, %v473
        %v478 = vsel %vm476, %v473, %v475
        %v481 = vsel %vm422, %v477, 0.0
        %v482 = vsel %vm423, %v478, 0.0
        %483 = vrot.lane.b32.xlu0 %v392, 94
        %v484 = vpop.permute.xlu0 %483
        %485 = vrot.lane.b32.xlu0 %v393, 94
        %v486 = vpop.permute.xlu0 %485
        %487 = vrot.lane.b32.xlu0 %v394, 94
        %v488 = vpop.permute.xlu0 %487
        %vm489 = vcmask 769024
        %v490 = vsel %vm489, %v484, %v486
        %v491 = vsel %vm489, %v486, %v488
        %v494 = vsel %vm426, %v490, 0.0
        %v495 = vsel %vm427, %v491, 0.0
        %496 = vrot.lane.b32.xlu0 %v392, 127
        %v497 = vpop.permute.xlu0 %496
        %498 = vrot.lane.b32.xlu0 %v393, 127
        %v499 = vpop.permute.xlu0 %498
        %500 = vrot.lane.b32.xlu0 %v394, 127
        %v501 = vpop.permute.xlu0 %500
        %vm502 = vcmask 1039360
        %v503 = vsel %vm502, %v497, %v499
        %v504 = vsel %vm502, %v499, %v501
        %507 = vrot.lane.b32.xlu0 %v392, 111
        %v508 = vpop.permute.xlu0 %507
        %509 = vrot.lane.b32.xlu0 %v393, 111
        %v510 = vpop.permute.xlu0 %509
        %511 = vrot.lane.b32.xlu0 %v394, 111
        %v512 = vpop.permute.xlu0 %511
        %vm513 = vcmask 908288
        %v514 = vsel %vm513, %v508, %v510
        %v515 = vsel %vm513, %v510, %v512
        %518 = vrot.lane.b32.xlu0 %v392, 95
        %v519 = vpop.permute.xlu0 %518
        %520 = vrot.lane.b32.xlu0 %v393, 95
        %v521 = vpop.permute.xlu0 %520
        %522 = vrot.lane.b32.xlu0 %v394, 95
        %v523 = vpop.permute.xlu0 %522
        %vm524 = vcmask 777216
        %v525 = vsel %vm524, %v519, %v521
        %v526 = vsel %vm524, %v521, %v523
        %v529 = vld [vmem:[%s327] sm:$0xf]
        %vm530 = vcmask 588800
        %v532 = vsel %vm530, %v529, 0
        %534 = vmatprep.subr.mxu0 0.0
        %535 = vmatpush1.msra.mxu0 0.0
        %536 = vmatprep.subr.mxu0 0.0
        %537 = vmatpush1.msra.mxu0 0.0
        %538 = vmatprep.subr.mxu0 0.0
        %539 = vmatpush1.msra.mxu0 0.0
        %540 = vmatprep.subr.mxu0 0.0
        %541 = vmatpush1.msra.mxu0 0.0
        %542 = vmatprep.subr.mxu0 0.0
        %543 = vmatpush1.msra.mxu0 0.0
        %544 = vmatprep.subr.mxu0 0.0
        %545 = vmatpush1.msra.mxu0 0.0
        %546 = vmatprep.subr.mxu0 0.0
        %547 = vmatpush1.msra.mxu0 0.0
        %548 = vmatprep.subr.mxu0 %v495
        %549 = vmatpush1.msra.mxu0 %v494
        %550 = vmatprep.subr.mxu0 %v526
        %551 = vmatpush1.msra.mxu0 %v525
        %552 = vmatprep.subr.mxu0 %v482
        %553 = vmatpush1.msra.mxu0 %v481
        %554 = vmatprep.subr.mxu0 %v469
        %555 = vmatpush1.msra.mxu0 %v468
        %556 = vmatprep.subr.mxu0 %v515
        %557 = vmatpush1.msra.mxu0 %v514
        %558 = vmatprep.subr.mxu0 %v456
        %559 = vmatpush1.msra.mxu0 %v455
        %560 = vmatprep.subr.mxu0 %v443
        %561 = vmatpush1.msra.mxu0 %v442
        %562 = vmatprep.subr.mxu0 %v504
        %563 = vmatpush1.msra.mxu0 %v503
        %564 = vmatprep.subr.mxu0 %v425
        %565 = vmatpush1.msra.mxu0 %v424
        %566 = vmatprep.subr.mxu0 0.0
        %567 = vmatpush2.msra.mxu0 0.0
        %568 = vmatprep.subr.mxu0 0.0
        %569 = vmatpush2.msra.mxu0 0.0
        %570 = vmatprep.subr.mxu0 0.0
        %571 = vmatpush2.msra.mxu0 0.0
        %572 = vmatprep.subr.mxu0 0.0
        %573 = vmatpush2.msra.mxu0 0.0
        %574 = vmatprep.subr.mxu0 0.0
        %575 = vmatpush2.msra.mxu0 0.0
        %576 = vmatprep.subr.mxu0 0.0
        %577 = vmatpush2.msra.mxu0 0.0
        %578 = vmatprep.subr.mxu0 0.0
        %579 = vmatpush2.msra.mxu0 0.0
        %580 = vmatprep.subr.mxu0 0.0
        %581 = vmatpush2.msra.mxu0 0.0
        %582 = vmatprep.subr.mxu0 0.0
        %583 = vmatpush2.msra.mxu0 0.0
        %584 = vmatprep.subr.mxu0 0.0
        %585 = vmatpush2.msra.mxu0 0.0
        %586 = vmatprep.subr.mxu0 0.0
        %587 = vmatpush2.msra.mxu0 0.0
        %588 = vmatprep.subr.mxu0 0.0
        %589 = vmatpush2.msra.mxu0 0.0
        %590 = vmatprep.subr.mxu0 0.0
        %591 = vmatpush2.msra.mxu0 0.0
        %592 = vmatprep.subr.mxu0 0.0
        %593 = vmatpush2.msra.mxu0 0.0
        %594 = vmatprep.subr.mxu0 0.0
        %595 = vmatpush2.msra.mxu0 0.0
        %596 = vmatprep.subr.mxu0 0.0
        %597 = vmatpush2.msra.mxu0 0.0
        %598 = vmatprep.mubr.f32.mxu0 0.0
        %599 = vmatmul.mubr.f32.gmra.mxu0 %v532
        %v600 = vpop.f32.mrf.mxu0
        %v601 = vadd.f32 0.0, %v600
        %v602 = vpop.f32.mrf.mxu0
        %v603 = vadd.f32 0.0, %v602
        %604 = vdwg.mxu0
        %s605 = sld [smem:[#allocation3 + %s46]]
        %v606 = vld [vmem:[%s345] sm:$0xff]
        %v608 = vcombine.high %v606, %v606
        %v610 = vsub.f32 %v601, %v606
        %v611 = vsub.f32 %v603, %v608
        %v612 = vstv %s605
        %v613 = vmul.f32 %v612, %v610
        %v614 = vmul.f32 %v612, %v611
        %v617 = vcombine.low %v613, %v614
        %619 = vst [vmem:[%s384] sm:$0xff] %v617
        %p620 = scmp.eq.s32.totalorder %s46, 0
        // Predicated region
        $region53: #{tpu_custom_call.1} parent=35 // pred_check
          %p621 = pneg %p620
        $region54: #{tpu_custom_call.1} parent=35 // pred_check_branch
          %623 = sbr.rel (%p621) target = $region56
        $region55: #{tpu_custom_call.1} parent=35 // pred_region
          %s624 = sld [smem:[#allocation4]]
          %v625 = vld [vmem:[%s336] sm:$0xf]
          %v626 = vstv %s624
          %v627 = vmul.f32 %v626, %v625
          %vm628 = vcmask 584704
          %629 = vst.msk [vmem:[%s391] sm:$0xf] %vm628, %v627
        $region56: #{tpu_custom_call.1} parent=35 // pred_fallthru
          _
        %s630 = sand.u32 %s171, 1
        %s631 = scalar_lea.sflag [#allocation7], %s630
        %s632 = sand.u32 %s171, 1
        %s633 = smul.addr %s632, 8
        %s634 = scalar_lea.vmem [#allocation13], %s633
        %s635 = sand.u32 %s197, 1
        %s636 = scalar_lea.sflag [#allocation15], %s635
        %s637 = sand.u32 %s197, 1
        %s638 = smul.addr %s637, 4
        %s639 = scalar_lea.vmem [#allocation14], %s638
        // Predicated region
        $region57: #{tpu_custom_call.1} parent=35 // pred_check
          %p640 = pneg %p181
        $region58: #{tpu_custom_call.1} parent=35 // pred_check_branch
          %642 = sbr.rel (%p640) target = $region60
        $region59: #{tpu_custom_call.1} parent=35 // pred_region
          %s644 = ssub.s32 128, 128
          %645 = vsyncadd %s631, %s644
          %s646 = smul.addr %s45, 2
          %s647 = smul.addr %s46, 4
          %s648 = sadd.s32 %s646, %s647
          %s649 = smul.addr %s648, 64
          %s650 = scalar_lea.hbm %s6, %s649
          %s652 = sshll.u32 %s634, 4
          %s653 = int_to_ptr.vmem [resolvable:$true] %s652
          %655 = dma.vmem_to_hbm [thread:$0]  %s653, 128, %s650, %s631
        $region60: #{tpu_custom_call.1} parent=35 // pred_fallthru
          _
        // Predicated region
        $region61: #{tpu_custom_call.1} parent=35 // pred_check
          %p656 = pneg %p207
        $region62: #{tpu_custom_call.1} parent=35 // pred_check_branch
          %658 = sbr.rel (%p656) target = $region64
        $region63: #{tpu_custom_call.1} parent=35 // pred_region
          %s660 = ssub.s32 64, 64
          %661 = vsyncadd %s636, %s660
          %s662 = smul.addr %s45, 64
          %s663 = scalar_lea.hbm %s7, %s662
          %s665 = sshll.u32 %s639, 4
          %s666 = int_to_ptr.vmem [resolvable:$true] %s665
          %668 = dma.vmem_to_hbm [thread:$0]  %s666, 64, %s663, %s636
        $region64: #{tpu_custom_call.1} parent=35 // pred_fallthru
          _
      $region36: #{tpu_custom_call.1} parent=5 // pred_fallthru
        _
      %p669 = scmp.le.s32.totalorder 2, %s36
      // Predicated region
      $region65: #{tpu_custom_call.1} parent=5 // pred_check
        %p670 = pneg %p669
      $region66: #{tpu_custom_call.1} parent=5 // pred_check_branch
        %672 = sbr.rel (%p670) target = $region68
      $region67: #{tpu_custom_call.1} parent=5 // pred_region
        %s673 = ssub.s32 %s36, 2
        // Predicated region
        $region69: #{tpu_custom_call.1} parent=67 // pred_check
          %p674 = pneg %p187
        $region70: #{tpu_custom_call.1} parent=67 // pred_check_branch
          %676 = sbr.rel (%p674) target = $region72
        $region71: #{tpu_custom_call.1} parent=67 // pred_region
          %s677 = sand.u32 %s172, 1
          %s678 = scalar_lea.sflag [#allocation7], %s677
          %s679 = sand.u32 %s172, 1
          %s680 = smul.addr %s679, 8
          %s681 = scalar_lea.vmem [#allocation13], %s680
          %682 = dma.done %s678, 128
        $region72: #{tpu_custom_call.1} parent=67 // pred_fallthru
          _
        // Predicated region
        $region73: #{tpu_custom_call.1} parent=67 // pred_check
          %p683 = pneg %p213
        $region74: #{tpu_custom_call.1} parent=67 // pred_check_branch
          %685 = sbr.rel (%p683) target = $region76
        $region75: #{tpu_custom_call.1} parent=67 // pred_region
          %s686 = sand.u32 %s198, 1
          %s687 = scalar_lea.sflag [#allocation15], %s686
          %s688 = sand.u32 %s198, 1
          %s689 = smul.addr %s688, 4
          %s690 = scalar_lea.vmem [#allocation14], %s689
          %691 = dma.done %s687, 64
        $region76: #{tpu_custom_call.1} parent=67 // pred_fallthru
          _
      $region68: #{tpu_custom_call.1} parent=5 // pred_fallthru
        _
    $region6: #{tpu_custom_call.1} parent=1 // loop_footer
      %s40 = sadd.s32 1, %s36
    $region7: #{tpu_custom_call.1} parent=1 // loop_footer_branch
      %35 = sbr.rel target = $region3
    $region8: #{tpu_custom_call.1} parent=1 // loop_exit
      _
    %692 = vsyncpa [#allocation6], 1
    %s693 = scalar_lea.sflag [#allocation6], 1
    %694 = vsyncpa %s693, 1
    %695 = vsyncpa [#allocation9], 1
    %s696 = scalar_lea.sflag [#allocation9], 1
    %697 = vsyncpa %s696, 1
    %698 = vsyncpa [#allocation12], 1
    %s699 = scalar_lea.sflag [#allocation12], 1
    %700 = vsyncpa %s699, 1
    %701 = vsyncpa [#allocation7], 1
    %s702 = scalar_lea.sflag [#allocation7], 1
    %703 = vsyncpa %s702, 1
    %704 = vsyncpa [#allocation15], 1
    %s705 = scalar_lea.sflag [#allocation15], 1
    %706 = vsyncpa %s705, 1

</llo_original>
